<compile_context>
chip_gen: v5e
topology: v5e:2x2
jax: 0.10.0
libtpu: 0.0.40
codegen_flags: <defaults>
</compile_context>

<pallas_src>
import math
from functools import partial

import jax
import jax.numpy as jnp
from jax import lax
from jax.experimental import pallas as pl
from jax.experimental.pallas import tpu as pltpu


# Above the v5e (16 MiB) / v6e (32 MiB) scoped defaults, below v7x's 64 MiB physical.
_VMEM_LIMIT_BYTES = 48 * 1024 * 1024


def _pick_tile(dim, preferred):
    """Largest power-of-two tile <= preferred that divides dim (>= 8), else the full dim."""
    t = min(preferred, dim)
    while t >= 8:
        if dim % t == 0:
            return t
        t //= 2
    # TODO(synk): pad + mask ragged dims instead of falling back to the full extent.
    return dim


def _mosaic(semantics):
    return pltpu.CompilerParams(dimension_semantics=semantics,
                                vmem_limit_bytes=_VMEM_LIMIT_BYTES)


# ----------------------------- RoPE tables -----------------------------

def get_rope_embedding(head_dim, seq_len, base=10000.0):
    """Interleaved cos/sin, identical to the PyTorch reference (repeat_interleave)."""
    i = jnp.arange(0, head_dim, 2, dtype=jnp.float32)
    theta = base ** (-i / head_dim)
    pos = jnp.arange(seq_len, dtype=jnp.float32)
    m_theta = jnp.outer(pos, theta)
    cos = jnp.repeat(jnp.cos(m_theta), 2, axis=1)
    sin = jnp.repeat(jnp.sin(m_theta), 2, axis=1)
    return cos, sin


def get_rope_half_embedding(head_dim, seq_len, base=10000.0):
    """Half-width (S, Dh/2) cos/sin used by the kernel (one value per rotation pair)."""
    i = jnp.arange(0, head_dim, 2, dtype=jnp.float32)
    theta = base ** (-i / head_dim)
    pos = jnp.arange(seq_len, dtype=jnp.float32)
    m_theta = jnp.outer(pos, theta)
    return jnp.cos(m_theta), jnp.sin(m_theta)


def _even_odd_split_perm(num_heads, head_dim):
    """Per-head permutation [0,2,4,...,1,3,5,...] of Wq/Wk output features.

    With this layout the interleaved RoPE rotation is elementwise on the two
    contiguous halves; q.k^T is invariant under the (shared) permutation.
    """
    perm = []
    for h in range(num_heads):
        base = h * head_dim
        perm.extend(base + j for j in range(0, head_dim, 2))
        perm.extend(base + j for j in range(1, head_dim, 2))
    return jnp.asarray(perm, dtype=jnp.int32)


# ------------------- head-major projection GEMM (x @ W -> per-head) -------------------

def _head_proj_kernel(x_ref, w_ref, o_ref, acc_ref):
    # x: (tm, tk), w: (1, tk, Dh), o: (1, tm, Dh), acc: (tm, Dh) f32
    @pl.when(pl.program_id(2) == 0)
    def _():
        acc_ref[...] = jnp.zeros_like(acc_ref)

    acc_ref[...] += jnp.dot(x_ref[...], w_ref[0],
                            preferred_element_type=jnp.float32)

    @pl.when(pl.program_id(2) == pl.num_programs(2) - 1)
    def _():
        o_ref[0] = acc_ref[...].astype(o_ref.dtype)


def head_projection(x2d, w_heads, *, tm=512, tk=512):
    """x2d: (M, K), w_heads: (NHT, K, Dh) -> head-major (NHT, M, Dh)."""
    M, K = x2d.shape
    NHT, K2, Dh = w_heads.shape
    assert K == K2
    tm = _pick_tile(M, tm)
    tk = _pick_tile(K, tk)
    grid = (M // tm, NHT, K // tk)
    return pl.pallas_call(
        _head_proj_kernel,
        out_shape=jax.ShapeDtypeStruct((NHT, M, Dh), x2d.dtype),
        grid=grid,
        in_specs=[
            pl.BlockSpec((tm, tk), lambda i, j, kk: (i, kk)),
            pl.BlockSpec((1, tk, Dh), lambda i, j, kk: (j, kk, 0)),
        ],
        out_specs=pl.BlockSpec((1, tm, Dh), lambda i, j, kk: (j, i, 0)),
        scratch_shapes=[pltpu.VMEM((tm, Dh), jnp.float32)],
        compiler_params=_mosaic(("parallel", "parallel", "arbitrary")),
    )(x2d, w_heads)


# ------------------- output projection (reduce over heads, no transpose) -------------------

def _oproj_kernel(x_ref, w_ref, o_ref, acc_ref):
    # x: (1, tm, Dh), w: (1, Dh, tn), o: (tm, tn), acc: (tm, tn) f32
    @pl.when(pl.program_id(2) == 0)
    def _():
        acc_ref[...] = jnp.zeros_like(acc_ref)

    acc_ref[...] += jnp.dot(x_ref[0], w_ref[0],
                            preferred_element_type=jnp.float32)

    @pl.when(pl.program_id(2) == pl.num_programs(2) - 1)
    def _():
        o_ref[...] = acc_ref[...].astype(o_ref.dtype)


def output_projection(o_heads, w_heads, *, tm=512, tn=512):
    """o_heads: (NH, M, Dh), w_heads: (NH, Dh, N) -> (M, N) == concat_heads(o) @ W."""
    NH, M, Dh = o_heads.shape
    NH2, Dh2, N = w_heads.shape
    assert NH == NH2 and Dh == Dh2
    tm = _pick_tile(M, tm)
    tn = _pick_tile(N, tn)
    grid = (M // tm, N // tn, NH)        # head axis is the K reduction
    return pl.pallas_call(
        _oproj_kernel,
        out_shape=jax.ShapeDtypeStruct((M, N), o_heads.dtype),
        grid=grid,
        in_specs=[
            pl.BlockSpec((1, tm, Dh), lambda i, j, h: (h, i, 0)),
            pl.BlockSpec((1, Dh, tn), lambda i, j, h: (h, 0, j)),
        ],
        out_specs=pl.BlockSpec((tm, tn), lambda i, j, h: (i, j)),
        scratch_shapes=[pltpu.VMEM((tm, tn), jnp.float32)],
        compiler_params=_mosaic(("parallel", "parallel", "arbitrary")),
    )(o_heads, w_heads)


# ----------------------------- flash attention core -----------------------------

def _flash_kernel(*refs, head_dim, is_rope, use_mask):
    it = iter(refs)
    q_ref = next(it)
    k_ref = next(it)
    v_ref = next(it)
    mask_ref = next(it) if use_mask else None
    if is_rope:
        cq_ref = next(it)
        sq_ref = next(it)
        ck_ref = next(it)
        sk_ref = next(it)
    o_ref = next(it)
    m_sc = next(it)
    l_sc = next(it)
    acc_sc = next(it)

    kv_step = pl.program_id(3)

    @pl.when(kv_step == 0)
    def _():
        m_sc[...] = jnp.full_like(m_sc, -jnp.inf)
        l_sc[...] = jnp.zeros_like(l_sc)
        acc_sc[...] = jnp.zeros_like(acc_sc)

    q = q_ref[0]                       # (tq, Dh)
    k = k_ref[0]                       # (tkv, Dh)
    v = v_ref[0]                       # (tkv, Dh)
    dt = q.dtype

    if is_rope:
        Dh2 = head_dim // 2
        cq = cq_ref[...]               # (tq, Dh2) f32
        sq = sq_ref[...]
        ck = ck_ref[...]               # (tkv, Dh2) f32
        sk = sk_ref[...]
        qa = q[:, :Dh2].astype(jnp.float32)
        qb = q[:, Dh2:].astype(jnp.float32)
        ka = k[:, :Dh2].astype(jnp.float32)
        kb = k[:, Dh2:].astype(jnp.float32)
        # Weights were permuted to a per-head [evens | odds] layout, so the
        # interleaved rotation is plain elementwise math; halves are concatenated
        # back so the score matmul is ONE full-Dh MXU contraction.
        q = jnp.concatenate([qa * cq - qb * sq, qb * cq + qa * sq], axis=-1).astype(dt)
        k = jnp.concatenate([ka * ck - kb * sk, kb * ck + ka * sk], axis=-1).astype(dt)

    # contract last dims directly: no explicit transpose/relayout of k.
    s = lax.dot_general(q, k, (((1,), (1,)), ((), ())),
                        preferred_element_type=jnp.float32)          # (tq, tkv)

    if use_mask:
        mask_tile = mask_ref[...].astype(jnp.float32)                # (tq, tkv)
        s = jnp.where(mask_tile != 0.0, jnp.finfo(jnp.float32).min, s)

    m_prev = m_sc[...]                                               # (tq, 1)
    m_new = jnp.maximum(m_prev, jnp.max(s, axis=-1, keepdims=True))
    alpha = jnp.exp(m_prev - m_new)
    p = jnp.exp(s - m_new)                                           # (tq, tkv)
    l_sc[...] = alpha * l_sc[...] + jnp.sum(p, axis=-1, keepdims=True)
    acc_sc[...] = alpha * acc_sc[...] + jnp.dot(
        p.astype(v.dtype), v, preferred_element_type=jnp.float32)
    m_sc[...] = m_new

    @pl.when(kv_step == pl.num_programs(3) - 1)
    def _():
        inv_l = pl.reciprocal(l_sc[...], approx=True)
        o_ref[0] = (acc_sc[...] * inv_l).astype(o_ref.dtype)


def flash_mha(q_heads, k_heads, v_heads, cos_half, sin_half, mask_i8, *,
              batch, num_heads, seq_q, seq_kv, head_dim,
              q_off=0, k_off=0, v_off=0, is_rope=False, tq=256, tkv=128):
    """q/k/v_heads: head-major (n_heads_total, B*S, Dh). Returns (NH, B*Sq, Dh)."""
    NH, Dh = num_heads, head_dim
    tq = _pick_tile(seq_q, tq)
    tkv = _pick_tile(seq_kv, tkv)
    nq, nkv = seq_q // tq, seq_kv // tkv
    use_mask = mask_i8 is not None
    grid = (batch, NH, nq, nkv)

    in_specs = [
        pl.BlockSpec((1, tq, Dh), lambda b, h, qi, kv: (q_off + h, b * nq + qi, 0)),
        pl.BlockSpec((1, tkv, Dh), lambda b, h, qi, kv: (k_off + h, b * nkv + kv, 0)),
        pl.BlockSpec((1, tkv, Dh), lambda b, h, qi, kv: (v_off + h, b * nkv + kv, 0)),
    ]
    args = [q_heads, k_heads, v_heads]

    if use_mask:
        in_specs.append(pl.BlockSpec((tq, tkv), lambda b, h, qi, kv: (qi, kv)))
        args.append(mask_i8)

    if is_rope:
        Dh2 = Dh // 2
        in_specs += [
            pl.BlockSpec((tq, Dh2), lambda b, h, qi, kv: (qi, 0)),    # cos @ q rows
            pl.BlockSpec((tq, Dh2), lambda b, h, qi, kv: (qi, 0)),    # sin @ q rows
            pl.BlockSpec((tkv, Dh2), lambda b, h, qi, kv: (kv, 0)),   # cos @ k rows
            pl.BlockSpec((tkv, Dh2), lambda b, h, qi, kv: (kv, 0)),   # sin @ k rows
        ]
        args += [cos_half, sin_half, cos_half, sin_half]

    kernel = partial(_flash_kernel, head_dim=Dh, is_rope=is_rope, use_mask=use_mask)

    return pl.pallas_call(
        kernel,
        out_shape=jax.ShapeDtypeStruct((NH, batch * seq_q, Dh), q_heads.dtype),
        grid=grid,
        in_specs=in_specs,
        out_specs=pl.BlockSpec((1, tq, Dh), lambda b, h, qi, kv: (h, b * nq + qi, 0)),
        scratch_shapes=[
            pltpu.VMEM((tq, 1), jnp.float32),     # running max
            pltpu.VMEM((tq, 1), jnp.float32),     # running denom
            pltpu.VMEM((tq, Dh), jnp.float32),    # output accumulator
        ],
        compiler_params=_mosaic(("parallel", "parallel", "parallel", "arbitrary")),
    )(*args)


# ----------------------------- module wrapper -----------------------------

class MultiHeadAttentionPallas:
    def __init__(self, hidden_size, num_heads, seq_len, base=10000.0,
                 is_rope=False, key=None, compute_dtype=jnp.float32):
        assert hidden_size % num_heads == 0
        self.hidden_size = hidden_size
        self.num_heads = num_heads
        self.head_dim = hidden_size // num_heads
        assert self.head_dim % 2 == 0
        self.is_rope = is_rope
        self.compute_dtype = compute_dtype

        bound = 1.0 / math.sqrt(hidden_size)
        k1, k2, k3, k4 = jax.random.split(key, 4)

        def init(kk):  # PyTorch nn.Linear weight layout: (out, in)
            return jax.random.uniform(kk, (hidden_size, hidden_size),
                                      jnp.float32, -bound, bound)

        # original f32 weights (used by the pure-JAX reference)
        self.Wq, self.Wk, self.Wv, self.Wo = init(k1), init(k2), init(k3), init(k4)
        self.cos, self.sin = get_rope_embedding(self.head_dim, seq_len, base)
        self.cos_half, self.sin_half = get_rope_half_embedding(
            self.head_dim, seq_len, base)

        NH, Dh = num_heads, self.head_dim
        scale = 1.0 / math.sqrt(Dh)

        # kernel-side weights: 1/sqrt(Dh) folded into Wq; when RoPE is enabled,
        # Wq/Wk rows are permuted into the per-head even/odd split-half layout
        # (exact: RoPE is linear and q.k^T is invariant under the shared perm).
        if is_rope:
            perm = _even_odd_split_perm(NH, Dh)
            Wq_eff = self.Wq[perm] * scale
            Wk_eff = self.Wk[perm]
        else:
            Wq_eff = self.Wq * scale
            Wk_eff = self.Wk

        def to_heads(W):  # (H_out, H_in) -> head-major (NH, H_in, Dh)
            return W.reshape(NH, Dh, hidden_size).transpose(0, 2, 1)

        self._wq_heads = to_heads(Wq_eff).astype(compute_dtype)
        self._wk_heads = to_heads(Wk_eff).astype(compute_dtype)
        self._wv_heads = to_heads(self.Wv).astype(compute_dtype)
        self._wqkv_heads = jnp.concatenate(
            [self._wq_heads, self._wk_heads, self._wv_heads], axis=0)  # (3*NH, H, Dh)
        # o_proj consumed head-major: Wo^T with the input features grouped per head
        self._wo_heads = self.Wo.T.reshape(NH, Dh, hidden_size).astype(compute_dtype)

    def __call__(self, q, k, v, mask=None):
        B, Sq, H = q.shape
        Skv = k.shape[1]
        NH, Dh = self.num_heads, self.head_dim
        dt = self.compute_dtype

        if (q is k) and (k is v):
            # self-attention: one fused head-major QKV GEMM -> (3*NH, B*S, Dh)
            qkv = head_projection(q.reshape(B * Sq, H).astype(dt), self._wqkv_heads)
            q_heads = k_heads = v_heads = qkv
            q_off, k_off, v_off = 0, NH, 2 * NH
        else:
            q_heads = head_projection(q.reshape(B * Sq, H).astype(dt), self._wq_heads)
            k_heads = head_projection(k.reshape(B * Skv, H).astype(dt), self._wk_heads)
            v_heads = head_projection(v.reshape(B * Skv, H).astype(dt), self._wv_heads)
            q_off = k_off = v_off = 0

        if mask is not None:
            # TODO(synk): batch-/head-varying masks would need extra grid indexing;
            # only masks broadcastable over batch & heads (e.g. causal) are supported.
            m = jnp.asarray(mask)
            while m.ndim > 2:
                m = m[0]
            mask_i8 = jnp.broadcast_to(m, (Sq, Skv)).astype(jnp.int8)
        else:
            mask_i8 = None

        if self.is_rope:
            srope = max(Sq, Skv)
            cos_h, sin_h = self.cos_half[:srope], self.sin_half[:srope]
        else:
            cos_h = sin_h = None

        o_heads = flash_mha(
            q_heads, k_heads, v_heads, cos_h, sin_h, mask_i8,
            batch=B, num_heads=NH, seq_q=Sq, seq_kv=Skv, head_dim=Dh,
            q_off=q_off, k_off=k_off, v_off=v_off, is_rope=self.is_rope)

        out = output_projection(o_heads, self._wo_heads)   # (B*Sq, H), heads reduced
        return out.reshape(B, Sq, H)


# ----------------------------- plain-JAX reference -----------------------------

def reference_mha(q, k, v, Wq, Wk, Wv, Wo, cos, sin, num_heads, is_rope, mask=None):
    def lin(x, W):
        return x @ W.T

    qp, kp, vp = lin(q, Wq), lin(k, Wk), lin(v, Wv)
    B, S, H = qp.shape
    Dh = H // num_heads

    def split_heads(x):
        return x.reshape(B, S, num_heads, Dh).transpose(0, 2, 1, 3)

    qh, kh, vh = split_heads(qp), split_heads(kp), split_heads(vp)
    if is_rope:
        def rope(x):
            inv = jnp.stack((-x[..., 1::2], x[..., ::2]), axis=-1).reshape(x.shape)
            return x * cos[:S] + inv * sin[:S]
        qh, kh = rope(qh), rope(kh)

    s = jnp.einsum('bhqd,bhkd->bhqk', qh, kh) / math.sqrt(Dh)
    if mask is not None:
        s = jnp.where(mask, jnp.finfo(jnp.float32).min, s)
    w = jax.nn.softmax(s, axis=-1)
    o = jnp.einsum('bhqk,bhkd->bhqd', w, vh)
    o = o.transpose(0, 2, 1, 3).reshape(B, S, H)
    return lin(o, Wo)


# ----------------------------------- main -----------------------------------

if __name__ == "__main__":
    B, S, H, NH = 2, 8, 32, 4

    key = jax.random.PRNGKey(0)
    kx, kq, kk_, kv_, kw = jax.random.split(key, 5)
    x = jax.random.normal(kx, (B, S, H), jnp.float32)
    q = jax.random.normal(kq, (B, S, H), jnp.float32)
    k = jax.random.normal(kk_, (B, S, H), jnp.float32)
    v = jax.random.normal(kv_, (B, S, H), jnp.float32)
    causal = jnp.triu(jnp.ones((S, S), dtype=bool), k=1)[None, None]

    # f32 activations: tight comparison against the f32 reference
    mha = MultiHeadAttentionPallas(hidden_size=H, num_heads=NH, seq_len=S,
                                   base=10000.0, is_rope=True, key=kw,
                                   compute_dtype=jnp.float32)

    # case 1: self-attention (fused head-major QKV GEMM), RoPE, no mask
    out1 = mha(x, x, x, mask=None)
    jax.block_until_ready(out1)
    ref1 = reference_mha(x, x, x, mha.Wq, mha.Wk, mha.Wv, mha.Wo,
                         mha.cos, mha.sin, NH, is_rope=True, mask=None)
    assert jnp.allclose(out1, ref1, atol=2e-3, rtol=2e-3)

    # case 2: distinct q/k/v (separate projections), RoPE, causal mask
    out2 = mha(q, k, v, mask=causal)
    jax.block_until_ready(out2)
    ref2 = reference_mha(q, k, v, mha.Wq, mha.Wk, mha.Wv, mha.Wo,
                         mha.cos, mha.sin, NH, is_rope=True, mask=causal)
    assert jnp.allclose(out2, ref2, atol=2e-3, rtol=2e-3)

    # case 3: no RoPE, self-attention, no mask
    mha_plain = MultiHeadAttentionPallas(hidden_size=H, num_heads=NH, seq_len=S,
                                         base=10000.0, is_rope=False, key=kw,
                                         compute_dtype=jnp.float32)
    out3 = mha_plain(x, x, x, mask=None)
    jax.block_until_ready(out3)
    ref3 = reference_mha(x, x, x, mha_plain.Wq, mha_plain.Wk, mha_plain.Wv,
                         mha_plain.Wo, mha_plain.cos, mha_plain.sin, NH,
                         is_rope=False, mask=None)
    assert jnp.allclose(out3, ref3, atol=2e-3, rtol=2e-3)

    # case 4: bf16 activations/weights (MXU-native path), f32 accumulation;
    # compared against the f32 reference with a bf16-appropriate tolerance.
    mha_bf16 = MultiHeadAttentionPallas(hidden_size=H, num_heads=NH, seq_len=S,
                                        base=10000.0, is_rope=True, key=kw,
                                        compute_dtype=jnp.bfloat16)
    out4 = mha_bf16(x, x, x, mask=causal)
    jax.block_until_ready(out4)
    ref4 = reference_mha(x, x, x, mha_bf16.Wq, mha_bf16.Wk, mha_bf16.Wv,
                         mha_bf16.Wo, mha_bf16.cos, mha_bf16.sin, NH,
                         is_rope=True, mask=causal)
    assert jnp.allclose(out4.astype(jnp.float32), ref4, atol=5e-2, rtol=5e-2)

    print("KERNEL_OK")
</pallas_src>

<mosaic_0001>
module attributes {stable_mosaic.version = 11 : i64} {
  func.func @_head_proj_kernel(%arg0: i32, %arg1: i32, %arg2: i32, %arg3: memref<16x32xf32, #tpu.memory_space<vmem>>, %arg4: memref<1x32x8xf32, #tpu.memory_space<vmem>>, %arg5: memref<1x16x8xf32, #tpu.memory_space<vmem>>, %arg6: memref<16x8xf32, #tpu.memory_space<vmem>>) attributes {dimension_semantics = [#tpu.dimension_semantics<parallel>, #tpu.dimension_semantics<parallel>, #tpu.dimension_semantics<arbitrary>], iteration_bounds = array<i64: 1, 12, 1>, scalar_prefetch = 0 : i64, scratch_operands = 1 : i64, tpu.core_type = #tpu.core_type<tc>, window_params = [{transform_indices = @transform_0, window_bounds = array<i64: 16, 32>}, {transform_indices = @transform_1, window_bounds = array<i64: 1, 32, 8>}, {transform_indices = @transform_2, window_bounds = array<i64: 1, 16, 8>}]} {
    %c0_i32 = arith.constant 0 : i32
    %0 = arith.cmpi eq, %arg2, %c0_i32 : i32
    %1 = arith.extui %0 : i1 to i32
    %c0_i32_0 = arith.constant 0 : i32
    %2 = arith.cmpi ne, %1, %c0_i32_0 : i32
    scf.if %2 {
      %cst_11 = arith.constant 0.000000e+00 : f32
      %13 = vector.broadcast %cst_11 : f32 to vector<16x8xf32>
      %c0_12 = arith.constant 0 : index
      %c0_13 = arith.constant 0 : index
      %14 = vector.load %arg6[%c0_12, %c0_13] : memref<16x8xf32, #tpu.memory_space<vmem>>, vector<16x8xf32>
      tpu.vector_store %arg6[%c0_12, %c0_13], %13 {strides = array<i32>} : memref<16x8xf32, #tpu.memory_space<vmem>>, vector<16x8xf32>,
    } else {
    }
    %c0 = arith.constant 0 : index
    %c0_1 = arith.constant 0 : index
    %3 = vector.load %arg6[%c0, %c0_1] : memref<16x8xf32, #tpu.memory_space<vmem>>, vector<16x8xf32>
    %c0_2 = arith.constant 0 : index
    %c0_3 = arith.constant 0 : index
    %4 = vector.load %arg3[%c0_2, %c0_3] : memref<16x32xf32, #tpu.memory_space<vmem>>, vector<16x32xf32>
    %c0_4 = arith.constant 0 : index
    %c0_5 = arith.constant 0 : index
    %c0_6 = arith.constant 0 : index
    %5 = vector.load %arg4[%c0_4, %c0_5, %c0_6] : memref<1x32x8xf32, #tpu.memory_space<vmem>>, vector<1x32x8xf32>
    %6 = vector.shape_cast %5 : vector<1x32x8xf32> to vector<32x8xf32>
    %cst = arith.constant dense<0.000000e+00> : vector<16x8xf32>
    %7 = tpu.matmul %4, %6, %cst {dimension_numbers = #tpu.dot_dimension_numbers<[1], [0], [0], [1], [0, 0, 1, 1], [], []>} : vector<16x32xf32>, vector<32x8xf32>, vector<16x8xf32> -> vector<16x8xf32>
    %8 = arith.addf %3, %7 : vector<16x8xf32>
    %c0_7 = arith.constant 0 : index
    %c0_8 = arith.constant 0 : index
    %9 = vector.load %arg6[%c0_7, %c0_8] : memref<16x8xf32, #tpu.memory_space<vmem>>, vector<16x8xf32>
    tpu.vector_store %arg6[%c0_7, %c0_8], %8 {strides = array<i32>} : memref<16x8xf32, #tpu.memory_space<vmem>>, vector<16x8xf32>,
    %c0_i32_9 = arith.constant 0 : i32
    %10 = arith.cmpi eq, %arg2, %c0_i32_9 : i32
    %11 = arith.extui %10 : i1 to i32
    %c0_i32_10 = arith.constant 0 : i32
    %12 = arith.cmpi ne, %11, %c0_i32_10 : i32
    scf.if %12 {
      %c0_11 = arith.constant 0 : index
      %c0_12 = arith.constant 0 : index
      %13 = vector.load %arg6[%c0_11, %c0_12] : memref<16x8xf32, #tpu.memory_space<vmem>>, vector<16x8xf32>
      %c0_13 = arith.constant 0 : index
      %c0_14 = arith.constant 0 : index
      %c0_15 = arith.constant 0 : index
      %14 = vector.load %arg5[%c0_13, %c0_14, %c0_15] : memref<1x16x8xf32, #tpu.memory_space<vmem>>, vector<1x16x8xf32>
      %15 = vector.shape_cast %14 : vector<1x16x8xf32> to vector<16x8xf32>
      %16 = vector.shape_cast %13 : vector<16x8xf32> to vector<1x16x8xf32>
      tpu.vector_store %arg5[%c0_13, %c0_14, %c0_15], %16 {strides = array<i32>} : memref<1x16x8xf32, #tpu.memory_space<vmem>>, vector<1x16x8xf32>,
    } else {
    }
    return
  }
  func.func @transform_0(%arg0: i32, %arg1: i32, %arg2: i32) -> (i32, i32) {
    %c0_i32 = arith.constant 0 : i32
    return %arg0, %arg2 : i32, i32
  }
  func.func @transform_1(%arg0: i32, %arg1: i32, %arg2: i32) -> (i32, i32, i32) {
    %c0_i32 = arith.constant 0 : i32
    %c0_i32_0 = arith.constant 0 : i32
    return %arg1, %arg2, %c0_i32 : i32, i32, i32
  }
  func.func @transform_2(%arg0: i32, %arg1: i32, %arg2: i32) -> (i32, i32, i32) {
    %c0_i32 = arith.constant 0 : i32
    %c0_i32_0 = arith.constant 0 : i32
    return %arg1, %arg0, %c0_i32 : i32, i32, i32
  }
}

</mosaic_0001>

<llo_original>
// kernel: tpu_custom_call.1
$region0: #{tpu_custom_call.1}
  #allocation0 [shape = 'u32[]', space=smem, size = 0x4, offset = 0x4, fixed_abs, tag = 'smem constant byte address 0x4 - core index']
  #allocation1 [shape = 'u32[72,128]{1,0:T(1,128)}', space=vmem, size = 0x9000, scoped, tag = 'internal scratch']
  #allocation2 [shape = 'f32[16,8]{1,0:T(8,128)}', space=vmem, size = 0x2000, scoped, tag = 'scratch operand']
  %s0 = inlined_call_operand.vmem [shape: f32[16,32], index: 0, kind: input, shape index: {}]
  %s1 = inlined_call_operand.vmem [shape: f32[12,32,8], index: 1, kind: input, shape index: {}]
  %s2 = inlined_call_operand.vmem [shape: f32[12,16,8], index: 2, kind: output, shape index: {}]
  %s3 = sld [smem:[#allocation0]]
  $region49: #{tpu_custom_call.1} parent=0
    _
  %s5 = ssub.s32 1, %s3
  %s6 = scalar_select 0, %s5, %s3
  loop: start=0, step=1, limit=14
  $region2: #{tpu_custom_call.1} parent=0 // loop_pre_header
    _
  $region3: #{tpu_custom_call.1} parent=0 // loop_header
    %s8 = sphi 0, %s12
    %p9 = scmp.ge.s32.totalorder %s8, 14
    %s15 = sphi 0, %s34
    %s16 = sphi 0, %s30
    %s17 = sphi 0, %s26
    %s18 = sphi 0, %s15
    %s19 = sphi 0, %s16
    %s20 = sphi 0, %s17
    %s21 = sphi 0, %s18
    %s22 = sphi 0, %s19
    %s23 = sphi 0, %s20
    %s39 = sphi 0, %s41
    %s42 = sphi 0, %s39
    %s43 = sphi 0, %s42
    %s59 = sphi 0, %s43
    %s67 = sphi 0, %s69
    %s70 = sphi 0, %s67
    %s71 = sphi 0, %s70
    %s87 = sphi 0, %s71
    %s95 = sphi 0, %s97
    %s98 = sphi 0, %s95
    %s99 = sphi 0, %s98
    %s115 = sphi 0, %s99
  $region4: #{tpu_custom_call.1} parent=0 // loop_header_branch
    %11 = sbr.rel (%p9) target = $region8
  $region5: #{tpu_custom_call.1} parent=0 // loop_body
    %s13 = ssub.s32 %s8, 1
    %s14 = ssub.s32 %s8, 2
    %s24 = sadd.s32 1, %s17
    %p25 = scmp.ge.s32.totalorder %s24, 1
    %s26 = scalar_select %p25, 0, %s24
    %s27 = sadd.s32 1, %s16
    %s28 = scalar_select %p25, %s27, %s16
    %p29 = scmp.ge.s32.totalorder %s28, 12
    %s30 = scalar_select %p29, 0, %s28
    %s31 = sadd.s32 1, %s15
    %s32 = scalar_select %p29, %s31, %s15
    %p33 = scmp.ge.s32.totalorder %s32, 1
    %s34 = scalar_select %p33, 0, %s32
    %s35 = ssub.s32 %s15, %s34
    %s36 = ssub.s32 %s17, %s26
    %s37 = sor.u32 %s35, %s36
    %p38 = scmp.eq.s32.totalorder %s37, 0
    %s40 = sadd.s32 %s39, 1
    %s41 = scalar_select %p38, %s39, %s40
    %p44 = pneg %p38
    %p45 = scmp.eq.s32.totalorder %s8, 11
    %p46 = por %p44, %p45
    %p47 = scmp.ne.s32.totalorder %s39, %s42
    %p48 = scmp.eq.s32.totalorder %s8, 0
    %p49 = por %p47, %p48
    %p50 = scmp.ne.s32.totalorder %s39, %s42
    %p51 = scmp.eq.s32.totalorder %s13, 11
    %p52 = por %p50, %p51
    %p53 = scmp.ne.s32.totalorder %s42, %s43
    %p54 = scmp.eq.s32.totalorder %s13, 0
    %p55 = por %p53, %p54
    %p56 = scmp.ne.s32.totalorder %s42, %s43
    %p57 = scmp.eq.s32.totalorder %s14, 11
    %p58 = por %p56, %p57
    %p60 = scmp.ne.s32.totalorder %s43, %s59
    %p61 = scmp.eq.s32.totalorder %s14, 0
    %p62 = por %p60, %p61
    %s63 = ssub.s32 %s16, %s30
    %s64 = ssub.s32 %s17, %s26
    %s65 = sor.u32 %s63, %s64
    %p66 = scmp.eq.s32.totalorder %s65, 0
    %s68 = sadd.s32 %s67, 1
    %s69 = scalar_select %p66, %s67, %s68
    %p72 = pneg %p66
    %p73 = scmp.eq.s32.totalorder %s8, 11
    %p74 = por %p72, %p73
    %p75 = scmp.ne.s32.totalorder %s67, %s70
    %p76 = scmp.eq.s32.totalorder %s8, 0
    %p77 = por %p75, %p76
    %p78 = scmp.ne.s32.totalorder %s67, %s70
    %p79 = scmp.eq.s32.totalorder %s13, 11
    %p80 = por %p78, %p79
    %p81 = scmp.ne.s32.totalorder %s70, %s71
    %p82 = scmp.eq.s32.totalorder %s13, 0
    %p83 = por %p81, %p82
    %p84 = scmp.ne.s32.totalorder %s70, %s71
    %p85 = scmp.eq.s32.totalorder %s14, 11
    %p86 = por %p84, %p85
    %p88 = scmp.ne.s32.totalorder %s71, %s87
    %p89 = scmp.eq.s32.totalorder %s14, 0
    %p90 = por %p88, %p89
    %s91 = ssub.s32 %s16, %s30
    %s92 = ssub.s32 %s15, %s34
    %s93 = sor.u32 %s91, %s92
    %p94 = scmp.eq.s32.totalorder %s93, 0
    %s96 = sadd.s32 %s95, 1
    %s97 = scalar_select %p94, %s95, %s96
    %p100 = pneg %p94
    %p101 = scmp.eq.s32.totalorder %s8, 11
    %p102 = por %p100, %p101
    %p103 = scmp.ne.s32.totalorder %s95, %s98
    %p104 = scmp.eq.s32.totalorder %s8, 0
    %p105 = por %p103, %p104
    %p106 = scmp.ne.s32.totalorder %s95, %s98
    %p107 = scmp.eq.s32.totalorder %s13, 11
    %p108 = por %p106, %p107
    %p109 = scmp.ne.s32.totalorder %s98, %s99
    %p110 = scmp.eq.s32.totalorder %s13, 0
    %p111 = por %p109, %p110
    %p112 = scmp.ne.s32.totalorder %s98, %s99
    %p113 = scmp.eq.s32.totalorder %s14, 11
    %p114 = por %p112, %p113
    %p116 = scmp.ne.s32.totalorder %s99, %s115
    %p117 = scmp.eq.s32.totalorder %s14, 0
    %p118 = por %p116, %p117
    %p119 = scmp.le.s32.totalorder 1, %s8
    %p120 = scmp.lt.s32.totalorder %s8, 13
    %p121 = pnand %p119, %p120
    %p122 = pneg %p121
    // Predicated region
    $region9: #{tpu_custom_call.1} parent=5 // pred_check
      _
    $region10: #{tpu_custom_call.1} parent=5 // pred_check_branch
      %124 = sbr.rel (%p121) target = $region12
    $region11: #{tpu_custom_call.1} parent=5 // pred_region
      %s125 = ssub.s32 %s8, 1
      // Predicated region
      $region13: #{tpu_custom_call.1} parent=11 // pred_check
        %p126 = pneg %p55
      $region14: #{tpu_custom_call.1} parent=11 // pred_check_branch
        %128 = sbr.rel (%p126) target = $region16
      $region15: #{tpu_custom_call.1} parent=11 // pred_region
        %s129 = smul.u32 2, %s18
        %p130 = scmp.lt.s32.totalorder %s129, 1
        %s131 = scalar_select %p130, %s129, 1
        %p132 = scmp.lt.s32.totalorder %s20, 0
        %s133 = scalar_select %p132, %s20, 0
        %s134 = sadd.s32 %s133, %s131
        %s135 = smul.addr %s134, 8
        %s136 = scalar_lea.vmem %s0, %s135
        %s137 = smul.u32 2, %s18
      $region16: #{tpu_custom_call.1} parent=11 // pred_fallthru
        _
    $region12: #{tpu_custom_call.1} parent=5 // pred_fallthru
      _
    %p138 = scmp.lt.s32.totalorder %s8, 12
    // Predicated region
    $region17: #{tpu_custom_call.1} parent=5 // pred_check
      %p139 = pneg %p138
    $region18: #{tpu_custom_call.1} parent=5 // pred_check_branch
      %141 = sbr.rel (%p139) target = $region20
    $region19: #{tpu_custom_call.1} parent=5 // pred_region
      // Predicated region
      $region21: #{tpu_custom_call.1} parent=19 // pred_check
        %p142 = pneg %p77
      $region22: #{tpu_custom_call.1} parent=19 // pred_check_branch
        %144 = sbr.rel (%p142) target = $region24
      $region23: #{tpu_custom_call.1} parent=19 // pred_region
        %s145 = smul.u32 4, %s17
        %p146 = scmp.lt.s32.totalorder %s16, 11
        %s147 = scalar_select %p146, %s16, 11
        %p148 = scmp.lt.s32.totalorder %s145, 3
        %s149 = scalar_select %p148, %s145, 3
        %s150 = smul.addr %s147, 4
        %s151 = sadd.s32 %s149, %s150
        %s152 = smul.addr %s151, 8
        %s153 = scalar_lea.vmem %s1, %s152
        %s154 = smul.u32 4, %s17
      $region24: #{tpu_custom_call.1} parent=19 // pred_fallthru
        _
    $region20: #{tpu_custom_call.1} parent=5 // pred_fallthru
      _
    %p155 = scmp.le.s32.totalorder 1, %s8
    %p156 = scmp.lt.s32.totalorder %s8, 13
    %p157 = pnand %p155, %p156
    %p158 = pneg %p157
    // Predicated region
    $region25: #{tpu_custom_call.1} parent=5 // pred_check
      _
    $region26: #{tpu_custom_call.1} parent=5 // pred_check_branch
      %160 = sbr.rel (%p157) target = $region28
    $region27: #{tpu_custom_call.1} parent=5 // pred_region
      %s161 = ssub.s32 %s8, 1
      %s162 = smul.u32 2, %s18
      %p163 = scmp.lt.s32.totalorder %s162, 1
      %s164 = scalar_select %p163, %s162, 1
      %p165 = scmp.lt.s32.totalorder %s20, 0
      %s166 = scalar_select %p165, %s20, 0
      %s167 = sadd.s32 %s166, %s164
      %s168 = smul.addr %s167, 8
      %s169 = scalar_lea.vmem %s0, %s168
      %p170 = pneg %p55
      %p171 = pneg %p52
      %s172 = smul.u32 4, %s20
      %p173 = scmp.lt.s32.totalorder %s19, 11
      %s174 = scalar_select %p173, %s19, 11
      %p175 = scmp.lt.s32.totalorder %s172, 3
      %s176 = scalar_select %p175, %s172, 3
      %s177 = smul.addr %s174, 4
      %s178 = sadd.s32 %s176, %s177
      %s179 = smul.addr %s178, 8
      %s180 = scalar_lea.vmem %s1, %s179
      %p181 = pneg %p83
      %p182 = pneg %p80
      %p183 = pneg %p111
      %p184 = pneg %p108
      %s185 = smul.u32 2, %s18
      %p186 = scmp.lt.s32.totalorder %s19, 11
      %s187 = scalar_select %p186, %s19, 11
      %p188 = scmp.lt.s32.totalorder %s185, 1
      %s189 = scalar_select %p188, %s185, 1
      %s190 = smul.addr %s187, 2
      %s191 = sadd.s32 %s189, %s190
      %s192 = smul.addr %s191, 8
      %s193 = scalar_lea.vmem %s2, %s192
      %s194 = smul.u32 2, %s18
      %p195 = scmp.lt.s32.totalorder %s194, 1
      %s196 = scalar_select %p195, %s194, 1
      %p197 = scmp.lt.s32.totalorder %s20, 0
      %s198 = scalar_select %p197, %s20, 0
      %s199 = sadd.s32 %s198, %s196
      %s200 = smul.addr %s199, 8
      %s201 = scalar_lea.vmem %s0, %s200
      %s202 = smul.u32 2, %s18
      %s203 = smul.u32 4, %s20
      %p204 = scmp.lt.s32.totalorder %s19, 11
      %s205 = scalar_select %p204, %s19, 11
      %p206 = scmp.lt.s32.totalorder %s203, 3
      %s207 = scalar_select %p206, %s203, 3
      %s208 = smul.addr %s205, 4
      %s209 = sadd.s32 %s207, %s208
      %s210 = smul.addr %s209, 8
      %s211 = scalar_lea.vmem %s1, %s210
      %s212 = smul.u32 4, %s20
      %s213 = smul.u32 2, %s18
      %p214 = scmp.lt.s32.totalorder %s19, 11
      %s215 = scalar_select %p214, %s19, 11
      %p216 = scmp.lt.s32.totalorder %s213, 1
      %s217 = scalar_select %p216, %s213, 1
      %s218 = smul.addr %s215, 2
      %s219 = sadd.s32 %s217, %s218
      %s220 = smul.addr %s219, 8
      %s221 = scalar_lea.vmem %s2, %s220
      %s222 = smul.u32 2, %s18
      %p223 = scmp.eq.s32.totalorder %s20, 0
      // Predicated region
      $region29: #{tpu_custom_call.1} parent=27 // pred_check
        %p224 = pneg %p223
      $region30: #{tpu_custom_call.1} parent=27 // pred_check_branch
        %226 = sbr.rel (%p224) target = $region32
      $region31: #{tpu_custom_call.1} parent=27 // pred_region
        %vm227 = vcmask 64512
        %228 = vst.msk [vmem:[#allocation2] sm:$0xff] %vm227, 0.0
        %229 = vst.msk [vmem:[#allocation2 + $0x8] sm:$0xff] %vm227, 0.0
      $region32: #{tpu_custom_call.1} parent=27 // pred_fallthru
        _
      %v230 = vld [vmem:[#allocation2] sm:$0xff]
      %v231 = vld [vmem:[#allocation2 + $0x8] sm:$0xff]
      %v232 = vld [vmem:[%s201] sm:$0xff]
      %v233 = vld [vmem:[%s201 + $0x8] sm:$0xff]
      %v234 = vld [vmem:[%s211] sm:$0xff]
      %v235 = vld [vmem:[%s211 + $0x8] sm:$0xff]
      %v236 = vld [vmem:[%s211 + $0x10] sm:$0xff]
      %v237 = vld [vmem:[%s211 + $0x18] sm:$0xff]
      %vm238 = vcmask 261120
      %v240 = vsel %vm238, %v232, 0
      %v243 = vsel %vm238, %v233, 0
      %245 = vmatpush.msra.mxu0 0.0
      %246 = vmatpush.msra.mxu0 0.0
      %247 = vmatpush.msra.mxu0 0.0
      %248 = vmatpush.msra.mxu0 0.0
      %249 = vmatpush.msra.mxu0 0.0
      %250 = vmatpush.msra.mxu0 0.0
      %251 = vmatpush.msra.mxu0 0.0
      %252 = vmatpush.msra.mxu0 0.0
      %253 = vmatpush.msra.mxu0 0.0
      %254 = vmatpush.msra.mxu0 0.0
      %255 = vmatpush.msra.mxu0 0.0
      %256 = vmatpush.msra.mxu0 0.0
      %257 = vmatpush.msra.mxu0 %v237
      %258 = vmatpush.msra.mxu0 %v236
      %259 = vmatpush.msra.mxu0 %v235
      %260 = vmatpush.msra.mxu0 %v234
      %261 = vmatmul.f32.gmra.mxu0 %v240
      %v262 = vpop.f32.mrf.mxu0
      %v263 = vadd.f32 0.0, %v262
      %264 = vmatmul.f32.gmra.mxu0 %v243
      %v265 = vpop.f32.mrf.mxu0
      %v266 = vadd.f32 0.0, %v265
      %267 = vdwg.mxu0
      %v268 = vadd.f32 %v230, %v263
      %v269 = vadd.f32 %v231, %v266
      %vm270 = vcmask 64512
      %271 = vst.msk [vmem:[#allocation2] sm:$0xff] %vm270, %v268
      %272 = vst.msk [vmem:[#allocation2 + $0x8] sm:$0xff] %vm270, %v269
      // Predicated region
      $region33: #{tpu_custom_call.1} parent=27 // pred_check
        %p273 = pneg %p223
      $region34: #{tpu_custom_call.1} parent=27 // pred_check_branch
        %275 = sbr.rel (%p273) target = $region36
      $region35: #{tpu_custom_call.1} parent=27 // pred_region
        %v276 = vld [vmem:[#allocation2] sm:$0xff]
        %v277 = vld [vmem:[#allocation2 + $0x8] sm:$0xff]
        %278 = vst.msk [vmem:[%s221] sm:$0xff] %vm270, %v276
        %279 = vst.msk [vmem:[%s221 + $0x8] sm:$0xff] %vm270, %v277
      $region36: #{tpu_custom_call.1} parent=27 // pred_fallthru
        _
      %s280 = smul.u32 2, %s18
      %p281 = scmp.lt.s32.totalorder %s19, 11
      %s282 = scalar_select %p281, %s19, 11
      %p283 = scmp.lt.s32.totalorder %s280, 1
      %s284 = scalar_select %p283, %s280, 1
      %s285 = smul.addr %s282, 2
      %s286 = sadd.s32 %s284, %s285
      %s287 = smul.addr %s286, 8
      %s288 = scalar_lea.vmem %s2, %s287
      // Predicated region
      $region37: #{tpu_custom_call.1} parent=27 // pred_check
        %p289 = pneg %p108
      $region38: #{tpu_custom_call.1} parent=27 // pred_check_branch
        %291 = sbr.rel (%p289) target = $region40
      $region39: #{tpu_custom_call.1} parent=27 // pred_region
        %s292 = smul.u32 2, %s18
      $region40: #{tpu_custom_call.1} parent=27 // pred_fallthru
        _
    $region28: #{tpu_custom_call.1} parent=5 // pred_fallthru
      _
    %p293 = scmp.le.s32.totalorder 2, %s8
    // Predicated region
    $region41: #{tpu_custom_call.1} parent=5 // pred_check
      %p294 = pneg %p293
    $region42: #{tpu_custom_call.1} parent=5 // pred_check_branch
      %296 = sbr.rel (%p294) target = $region44
    $region43: #{tpu_custom_call.1} parent=5 // pred_region
      %s297 = ssub.s32 %s8, 2
      // Predicated region
      $region45: #{tpu_custom_call.1} parent=43 // pred_check
        %p298 = pneg %p114
      $region46: #{tpu_custom_call.1} parent=43 // pred_check_branch
        %300 = sbr.rel (%p298) target = $region48
      $region47: #{tpu_custom_call.1} parent=43 // pred_region
        %s301 = smul.u32 2, %s21
        %p302 = scmp.lt.s32.totalorder %s22, 11
        %s303 = scalar_select %p302, %s22, 11
        %p304 = scmp.lt.s32.totalorder %s301, 1
        %s305 = scalar_select %p304, %s301, 1
        %s306 = smul.addr %s303, 2
        %s307 = sadd.s32 %s305, %s306
        %s308 = smul.addr %s307, 8
        %s309 = scalar_lea.vmem %s2, %s308
      $region48: #{tpu_custom_call.1} parent=43 // pred_fallthru
        _
    $region44: #{tpu_custom_call.1} parent=5 // pred_fallthru
      _
  $region6: #{tpu_custom_call.1} parent=0 // loop_footer
    %s12 = sadd.s32 1, %s8
  $region7: #{tpu_custom_call.1} parent=0 // loop_footer_branch
    %7 = sbr.rel target = $region3
  $region8: #{tpu_custom_call.1} parent=0 // loop_exit
    _

</llo_original>
